<compile_context>
chip_gen: v7x
topology: tpu7x:2x2x1
jax: 0.10.0
libtpu: 0.0.40
codegen_flags: <defaults>
</compile_context>

<pallas_src>
import jax
import jax.numpy as jnp
from jax.experimental import pallas as pl
from jax.experimental.pallas import tpu as pltpu

_MB = 1024 * 1024


# ---------------------------------------------------------------- utilities --

def _round_up(x, n):
    return ((x + n - 1) // n) * n


# ----------------------------------------------------- in-kernel 2:4 pruning --

def _prune_2_4_block(x):
    """2:4 semi-structured prune along the last (lane) dim of a resident
    (tm, H) block: keep the 2 largest-|.| elements of every aligned group of
    4, zero the rest.  Ties go to the lower index (assumed
    prune_dense_static_sort convention).

    Implemented with lane rotations (XLU) + elementwise compares (VPU) only:
    no reshape to a last-dim-of-4 layout, no argsort.  Group membership and
    tie-breaking are decided from the neighbour's own (rolled) index, so the
    result is independent of the rotate direction convention.
    """
    tm, h = x.shape
    mag = jnp.abs(x).astype(jnp.float32)
    idx = jax.lax.broadcasted_iota(jnp.int32, (tm, h), 1)
    grp = idx >> 2                                 # group id = lane // 4
    rank = jnp.zeros((tm, h), dtype=jnp.int32)
    # Shifts covering in-group offsets {+-1, +-2, +-3} (mod h).
    shifts = sorted({s % h for s in (1, 2, 3, h - 1, h - 2, h - 3)} - {0})
    for s in shifts:
        nb_mag = pltpu.roll(mag, s, 1)
        nb_idx = pltpu.roll(idx, s, 1)
        same_group = (nb_idx >> 2) == grp
        beats = (nb_mag > mag) | ((nb_mag == mag) & (nb_idx < idx))
        rank = rank + (same_group & beats).astype(jnp.int32)
    return jnp.where(rank < 2, x, jnp.zeros_like(x))


# ------------------------------------------------------------------ kernels --

def _mlp_tail(xg, xu, wgu_ref, wd_ref, o_ref, acc_ref):
    """gate/up matmuls + SiLU gating + down-proj accumulation for one I tile."""
    gate = jnp.dot(xg, wgu_ref[0], preferred_element_type=jnp.float32)
    up = jnp.dot(xu, wgu_ref[1], preferred_element_type=jnp.float32)
    h = gate * jax.nn.sigmoid(gate) * up                 # SiLU(gate) * up, f32
    acc_ref[...] += jnp.dot(h.astype(wd_ref.dtype), wd_ref[...],
                            preferred_element_type=jnp.float32)

    @pl.when(pl.program_id(1) == pl.num_programs(1) - 1)
    def _finalize():
        o_ref[...] = acc_ref[...].astype(o_ref.dtype)


def _kernel_dense(x_ref, wgu_ref, wd_ref, o_ref, acc_ref):
    # sparsity_type is None: gate and up both see the dense activation.
    @pl.when(pl.program_id(1) == 0)
    def _init():
        acc_ref[...] = jnp.zeros_like(acc_ref)

    x = x_ref[...].astype(wgu_ref.dtype)
    _mlp_tail(x, x, wgu_ref, wd_ref, o_ref, acc_ref)


def _kernel_prune_shared(x_ref, wgu_ref, wd_ref, o_ref, acc_ref, xp_ref):
    # "cusparselt": gate and up both see the pruned activation.
    @pl.when(pl.program_id(1) == 0)
    def _init():
        acc_ref[...] = jnp.zeros_like(acc_ref)
        xp_ref[...] = _prune_2_4_block(x_ref[...]).astype(xp_ref.dtype)

    xp = xp_ref[...]
    _mlp_tail(xp, xp, wgu_ref, wd_ref, o_ref, acc_ref)


def _kernel_prune_up(x_ref, wgu_ref, wd_ref, o_ref, acc_ref, xp_ref):
    # "cutlass": gate sees the dense activation, up sees the pruned one.
    @pl.when(pl.program_id(1) == 0)
    def _init():
        acc_ref[...] = jnp.zeros_like(acc_ref)
        xp_ref[...] = _prune_2_4_block(x_ref[...]).astype(xp_ref.dtype)

    x = x_ref[...].astype(wgu_ref.dtype)
    _mlp_tail(x, xp_ref[...], wgu_ref, wd_ref, o_ref, acc_ref)


# --------------------------------------------- device-aware tiling decisions --

def _device_config():
    kind = ""
    try:
        kind = jax.devices()[0].device_kind.lower()
    except Exception:
        pass
    if "v7" in kind or "7x" in kind:
        # 64 MiB VMEM per TensorCore, 2 TCs: keep >=2 M tiles for megacore and
        # a tight VMEM budget.
        return dict(target_tm=512, max_ti=512, vmem_cap=48 * _MB, two_tc=True)
    if "v6" in kind:
        # 918 TF/s vs ~1.4 TB/s HBM: need tm ~>= 700 (bf16) to be MXU-bound.
        return dict(target_tm=1024, max_ti=1024, vmem_cap=100 * _MB, two_tc=False)
    if "v5" in kind:
        return dict(target_tm=512, max_ti=512, vmem_cap=96 * _MB, two_tc=False)
    if "v4" in kind:
        return dict(target_tm=512, max_ti=512, vmem_cap=96 * _MB, two_tc=True)
    if "v3" in kind or "v2" in kind:
        return dict(target_tm=256, max_ti=256, vmem_cap=12 * _MB, two_tc=False)
    return dict(target_tm=256, max_ti=512, vmem_cap=32 * _MB, two_tc=False)


def _vmem_usage(tm, ti, hidden, x_bytes, w_bytes, out_bytes, need_xp):
    u = 2 * tm * hidden * x_bytes              # activation block (2 buffers)
    u += 2 * 2 * hidden * ti * w_bytes         # stacked gate|up weight tile
    u += 2 * ti * hidden * w_bytes             # down weight tile
    u += 2 * tm * hidden * out_bytes           # output block
    u += tm * hidden * 4                       # f32 accumulator scratch
    if need_xp:
        u += tm * hidden * w_bytes             # pruned-activation scratch
    return u


def _tm_candidates(m, cfg):
    top = min(cfg["target_tm"], _round_up(m, 8))
    if cfg["two_tc"] and m >= 16 and _round_up(m, 8) <= cfg["target_tm"]:
        # Make sure the "parallel" M axis has >= 2 programs (both cores busy).
        top = min(top, _round_up(-(-m // 2), 8))
    cands, t = [], top
    while t >= 256:                            # multiples of 256 fill the MXU
        cands.append(t)
        t -= 256
    t = min(top, 128)
    while t >= 8:
        cands.append(t)
        t //= 2
    if not cands:
        cands = [max(8, top)]
    out, seen = [], set()
    for c in cands:
        if c not in seen:
            seen.add(c)
            out.append(c)
    return out


def _ti_candidates(i_pad, cfg):
    cands = []
    v = (min(cfg["max_ti"], i_pad) // 256) * 256
    while v >= 256:
        if i_pad % v == 0:
            cands.append(v)
        v -= 256
    if i_pad % 128 == 0 and 128 <= i_pad and 128 not in cands:
        cands.append(128)
    if i_pad not in cands:
        cands.append(i_pad)                    # tiny-I fallback: full I block
    return cands


def _choose_tiles(m, hidden, i_pad, x_bytes, w_bytes, out_bytes, need_xp, cfg):
    cap = cfg["vmem_cap"]
    headroom = 2 * _MB
    tms = _tm_candidates(m, cfg)
    tis = _ti_candidates(i_pad, cfg)
    for tm in tms:                             # prefer large tm (weight reuse)
        for ti in tis:
            if _vmem_usage(tm, ti, hidden, x_bytes, w_bytes, out_bytes,
                           need_xp) <= cap - headroom:
                return tm, ti
    return tms[-1], tis[-1]


# ----------------------------------------------------------- param prepping --

def _i_pad_granularity(inter):
    if inter >= 8192:
        return 1024
    if inter >= 1024:
        return 512
    if inter >= 256:
        return 256
    return 8


def prepare_params(gate_w, up_w, down_w, dtype=None):
    """One-time ("load-time") weight preparation.

      gate_w, up_w : (I, H)   nn.Linear (out_features, in_features)
      down_w       : (H, I)

    Returns (wgu, wd_t) with
      wgu  : (2, H, I_pad)  stacked [gate^T, up^T], zero-padded along I so the
                            intermediate dim tiles cleanly (padded columns are
                            zeros -> contribute nothing),
      wd_t : (I_pad, H)     down^T, zero-padded along I.

    Pass dtype=jnp.bfloat16 for production use: the v5e/v6e/v7x MXUs are
    bf16-native and it halves weight HBM traffic / VMEM footprint; the kernel
    still accumulates in f32.  Default (None) keeps the original dtype so the
    numerics match the reference module exactly.
    """
    inter, hidden = gate_w.shape
    assert up_w.shape == (inter, hidden) and down_w.shape == (hidden, inter)
    if dtype is not None:
        gate_w = gate_w.astype(dtype)
        up_w = up_w.astype(dtype)
        down_w = down_w.astype(dtype)
    i_pad = _round_up(inter, _i_pad_granularity(inter))
    pad = i_pad - inter
    wg_t, wu_t, wd_t = gate_w.T, up_w.T, down_w.T        # (H,I), (H,I), (I,H)
    if pad:
        wg_t = jnp.pad(wg_t, ((0, 0), (0, pad)))
        wu_t = jnp.pad(wu_t, ((0, 0), (0, pad)))
        wd_t = jnp.pad(wd_t, ((0, pad), (0, 0)))
    wgu = jnp.stack([wg_t, wu_t], axis=0)                # (2, H, I_pad)
    return wgu, wd_t


# ------------------------------------------------------------------ wrapper --

def mlp_act_sp(x, wgu, wd_t, *, sparsity_type=None, block_m=None, block_i=None):
    """Forward pass of MLP_act_sp.

    x    : (B, S, H)
    wgu  : (2, H, I_pad) from prepare_params
    wd_t : (I_pad, H)    from prepare_params
    (bias=False, hidden_act='silu', as in the default LLaMA config)
    """
    if sparsity_type not in (None, "cusparselt", "cutlass"):
        raise ValueError(f"unknown sparsity_type: {sparsity_type}")
    b, s, hidden = x.shape
    two, h_w, i_pad = wgu.shape
    assert two == 2 and h_w == hidden and wd_t.shape == (i_pad, hidden)
    need_xp = sparsity_type is not None
    if need_xp:
        assert hidden % 4 == 0, "hidden_size must be a multiple of 4 for 2:4"

    m = b * s
    out_dtype = x.dtype
    w_dtype = wgu.dtype
    x_bytes = jnp.dtype(x.dtype).itemsize
    w_bytes = jnp.dtype(w_dtype).itemsize
    out_bytes = jnp.dtype(out_dtype).itemsize

    cfg = _device_config()
    tm, ti = _choose_tiles(m, hidden, i_pad, x_bytes, w_bytes, out_bytes,
                           need_xp, cfg)
    if block_m is not None:
        tm = block_m
    if block_i is not None:
        ti = block_i
    assert tm % 8 == 0, "block_m must be a multiple of 8"
    assert i_pad % ti == 0, "block_i must divide the (padded) intermediate size"
    assert ti % 128 == 0 or ti == i_pad

    m_pad = _round_up(m, tm)
    x_flat = x.reshape(m, hidden)
    if m_pad != m:
        x_flat = jnp.pad(x_flat, ((0, m_pad - m), (0, 0)))

    scratch = [pltpu.VMEM((tm, hidden), jnp.float32)]      # f32 accumulator
    if need_xp:
        scratch.append(pltpu.VMEM((tm, hidden), w_dtype))  # pruned x, 1x/M tile

    kernel = {None: _kernel_dense,
              "cusparselt": _kernel_prune_shared,
              "cutlass": _kernel_prune_up}[sparsity_type]

    usage = _vmem_usage(tm, ti, hidden, x_bytes, w_bytes, out_bytes, need_xp)
    vmem_limit = None
    if usage + 8 * _MB > 16 * _MB:             # only raise when actually needed
        vmem_limit = int(min(usage + 8 * _MB, cfg["vmem_cap"]))

    cost = pl.CostEstimate(
        flops=int(6 * m_pad * hidden * i_pad),
        transcendentals=int(m_pad * i_pad),
        bytes_accessed=int((m_pad // tm) * 3 * hidden * i_pad * w_bytes
                           + m_pad * hidden * (x_bytes + out_bytes)),
    )

    out = pl.pallas_call(
        kernel,
        out_shape=jax.ShapeDtypeStruct((m_pad, hidden), out_dtype),
        grid_spec=pltpu.PrefetchScalarGridSpec(
            num_scalar_prefetch=0,
            grid=(m_pad // tm, i_pad // ti),           # reduction (I) axis last
            in_specs=[
                pl.BlockSpec((tm, hidden), lambda i, k: (i, 0)),        # x
                pl.BlockSpec((2, hidden, ti), lambda i, k: (0, 0, k)),  # Wg|Wu
                pl.BlockSpec((ti, hidden), lambda i, k: (k, 0)),        # Wd
            ],
            out_specs=pl.BlockSpec((tm, hidden), lambda i, k: (i, 0)),
            scratch_shapes=scratch,
        ),
        compiler_params=pltpu.CompilerParams(
            dimension_semantics=("parallel", "arbitrary"),
            vmem_limit_bytes=vmem_limit,
        ),
        cost_estimate=cost,
    )(x_flat, wgu, wd_t)

    if m_pad != m:
        out = out[:m]
    return out.reshape(b, s, hidden)


# ---------------------------------------------------------------- reference --

def _prune_2_4_ref(x_flat):
    m, h = x_flat.shape
    g = x_flat.reshape(m, h // 4, 4)
    mag = jnp.abs(g).astype(jnp.float32)
    a = mag[..., :, None]
    bb = mag[..., None, :]
    ia = jnp.arange(4, dtype=jnp.int32)[:, None]
    ib = jnp.arange(4, dtype=jnp.int32)[None, :]
    beats = (bb > a) | ((bb == a) & (ib < ia))
    rank = beats.sum(axis=-1)
    return (g * (rank < 2).astype(g.dtype)).reshape(m, h)


def _reference(x, wg, wu, wd, sparsity_type=None, weight_dtype=None):
    b, s, h = x.shape
    hi = jax.lax.Precision.HIGHEST
    if weight_dtype is None:
        rd = lambda a: a.astype(jnp.float32)
    else:
        rd = lambda a: a.astype(weight_dtype).astype(jnp.float32)
    xf = x.reshape(-1, h).astype(jnp.float32)
    wgf, wuf, wdf = rd(wg), rd(wu), rd(wd)
    if sparsity_type is None:
        xg = xu = xf
    elif sparsity_type == "cusparselt":
        p = _prune_2_4_ref(xf)
        xg = xu = p
    elif sparsity_type == "cutlass":
        xg, xu = xf, _prune_2_4_ref(xf)
    else:
        raise ValueError(sparsity_type)
    g = jnp.dot(rd(xg), wgf.T, precision=hi)
    u = jnp.dot(rd(xu), wuf.T, precision=hi)
    hact = jax.nn.silu(g) * u
    out = jnp.dot(rd(hact), wdf.T, precision=hi)
    return out.reshape(b, s, h).astype(x.dtype)


# --------------------------------------------------------------------- main --

if __name__ == "__main__":
    key = jax.random.PRNGKey(0)
    keys = jax.random.split(key, 8)

    # Config 1: small, lane-aligned shapes (single I tile).
    B, S, H, I = 2, 8, 128, 256
    x = jax.random.normal(keys[0], (B, S, H), jnp.float32)
    wg = jax.random.normal(keys[1], (I, H), jnp.float32) * 0.05
    wu = jax.random.normal(keys[2], (I, H), jnp.float32) * 0.05
    wd = jax.random.normal(keys[3], (H, I), jnp.float32) * 0.05

    params = prepare_params(wg, wu, wd)                    # f32 weights
    for st in (None, "cusparselt", "cutlass"):
        out = jax.block_until_ready(mlp_act_sp(x, *params, sparsity_type=st))
        ref = _reference(x, wg, wu, wd, sparsity_type=st)
        err = float(jnp.max(jnp.abs(out - ref)))
        assert jnp.allclose(out, ref, atol=1e-2, rtol=1e-2), (st, err)

    # Config 2: exercises M padding (24 -> 32), I padding (640 -> 768) and the
    # multi-step I reduction with the f32 accumulator.
    B2, S2, H2, I2 = 2, 12, 256, 640
    x2 = jax.random.normal(keys[4], (B2, S2, H2), jnp.float32)
    wg2 = jax.random.normal(keys[5], (I2, H2), jnp.float32) * 0.03
    wu2 = jax.random.normal(keys[6], (I2, H2), jnp.float32) * 0.03
    wd2 = jax.random.normal(keys[7], (H2, I2), jnp.float32) * 0.03

    params2 = prepare_params(wg2, wu2, wd2)
    for st in (None, "cusparselt", "cutlass"):
        ref2 = _reference(x2, wg2, wu2, wd2, sparsity_type=st)
        # explicit small tiles (forces a 2x3 grid)
        out2 = jax.block_until_ready(
            mlp_act_sp(x2, *params2, sparsity_type=st, block_m=16, block_i=256))
        err2 = float(jnp.max(jnp.abs(out2 - ref2)))
        assert jnp.allclose(out2, ref2, atol=1e-2, rtol=1e-2), (st, err2)
        # auto-tiled path
        out2a = jax.block_until_ready(mlp_act_sp(x2, *params2, sparsity_type=st))
        err2a = float(jnp.max(jnp.abs(out2a - ref2)))
        assert jnp.allclose(out2a, ref2, atol=1e-2, rtol=1e-2), (st, err2a)

    # Recommended production config: bf16 weights (f32 MXU accumulation); the
    # 2:4 mask is still computed on the original (f32) activations in-kernel.
    params_bf = prepare_params(wg2, wu2, wd2, dtype=jnp.bfloat16)
    out_bf = jax.block_until_ready(
        mlp_act_sp(x2, *params_bf, sparsity_type="cusparselt"))
    ref_bf = _reference(x2, wg2, wu2, wd2, sparsity_type="cusparselt",
                        weight_dtype=jnp.bfloat16)
    err_bf = float(jnp.max(jnp.abs(out_bf.astype(jnp.float32) - ref_bf)))
    assert jnp.allclose(out_bf.astype(jnp.float32), ref_bf,
                        atol=3e-2, rtol=3e-2), ("bf16", err_bf)

    print("KERNEL_OK")
</pallas_src>

<mosaic_0001>
module attributes {stable_mosaic.version = 11 : i64} {
  func.func @_kernel_dense(%arg0: i32, %arg1: i32, %arg2: memref<16x128xf32, #tpu.memory_space<vmem>>, %arg3: memref<2x128x256xf32, #tpu.memory_space<vmem>>, %arg4: memref<256x128xf32, #tpu.memory_space<vmem>>, %arg5: memref<16x128xf32, #tpu.memory_space<vmem>>, %arg6: memref<16x128xf32, #tpu.memory_space<vmem>>) attributes {dimension_semantics = [#tpu.dimension_semantics<parallel>, #tpu.dimension_semantics<arbitrary>], iteration_bounds = array<i64: 1, 1>, scalar_prefetch = 0 : i64, scratch_operands = 1 : i64, tpu.core_type = #tpu.core_type<tc>, window_params = [{transform_indices = @transform_0, window_bounds = array<i64: 16, 128>}, {transform_indices = @transform_1, window_bounds = array<i64: 2, 128, 256>}, {transform_indices = @transform_2, window_bounds = array<i64: 256, 128>}, {transform_indices = @transform_3, window_bounds = array<i64: 16, 128>}]} {
    %c0_i32 = arith.constant 0 : i32
    %0 = arith.cmpi eq, %arg1, %c0_i32 : i32
    %1 = arith.extui %0 : i1 to i32
    %c0_i32_0 = arith.constant 0 : i32
    %2 = arith.cmpi ne, %1, %c0_i32_0 : i32
    scf.if %2 {
      %cst_18 = arith.constant 0.000000e+00 : f32
      %25 = vector.broadcast %cst_18 : f32 to vector<16x128xf32>
      %c0_19 = arith.constant 0 : index
      %c0_20 = arith.constant 0 : index
      %26 = vector.load %arg6[%c0_19, %c0_20] : memref<16x128xf32, #tpu.memory_space<vmem>>, vector<16x128xf32>
      tpu.vector_store %arg6[%c0_19, %c0_20], %25 {strides = array<i32>} : memref<16x128xf32, #tpu.memory_space<vmem>>, vector<16x128xf32>,
    } else {
    }
    %c0 = arith.constant 0 : index
    %c0_1 = arith.constant 0 : index
    %3 = vector.load %arg2[%c0, %c0_1] : memref<16x128xf32, #tpu.memory_space<vmem>>, vector<16x128xf32>
    %c0_2 = arith.constant 0 : index
    %c0_3 = arith.constant 0 : index
    %c0_4 = arith.constant 0 : index
    %4 = vector.load %arg3[%c0_2, %c0_3, %c0_4] : memref<2x128x256xf32, #tpu.memory_space<vmem>>, vector<1x128x256xf32>
    %5 = vector.shape_cast %4 : vector<1x128x256xf32> to vector<128x256xf32>
    %cst = arith.constant dense<0.000000e+00> : vector<16x256xf32>
    %6 = tpu.matmul %3, %5, %cst {dimension_numbers = #tpu.dot_dimension_numbers<[1], [0], [0], [1], [0, 0, 1, 1], [], []>} : vector<16x128xf32>, vector<128x256xf32>, vector<16x256xf32> -> vector<16x256xf32>
    %c1 = arith.constant 1 : index
    %c0_5 = arith.constant 0 : index
    %c0_6 = arith.constant 0 : index
    %7 = vector.load %arg3[%c1, %c0_5, %c0_6] : memref<2x128x256xf32, #tpu.memory_space<vmem>>, vector<1x128x256xf32>
    %8 = vector.shape_cast %7 : vector<1x128x256xf32> to vector<128x256xf32>
    %cst_7 = arith.constant dense<0.000000e+00> : vector<16x256xf32>
    %9 = tpu.matmul %3, %8, %cst_7 {dimension_numbers = #tpu.dot_dimension_numbers<[1], [0], [0], [1], [0, 0, 1, 1], [], []>} : vector<16x128xf32>, vector<128x256xf32>, vector<16x256xf32> -> vector<16x256xf32>
    %10 = arith.negf %6 : vector<16x256xf32>
    %11 = math.exp %10 : vector<16x256xf32>
    %cst_8 = arith.constant 1.000000e+00 : f32
    %12 = vector.broadcast %cst_8 : f32 to vector<16x256xf32>
    %13 = arith.addf %12, %11 : vector<16x256xf32>
    %14 = arith.divf %12, %13 : vector<16x256xf32>
    %15 = arith.mulf %6, %14 : vector<16x256xf32>
    %16 = arith.mulf %15, %9 : vector<16x256xf32>
    %c0_9 = arith.constant 0 : index
    %c0_10 = arith.constant 0 : index
    %17 = vector.load %arg6[%c0_9, %c0_10] : memref<16x128xf32, #tpu.memory_space<vmem>>, vector<16x128xf32>
    %c0_11 = arith.constant 0 : index
    %c0_12 = arith.constant 0 : index
    %18 = vector.load %arg4[%c0_11, %c0_12] : memref<256x128xf32, #tpu.memory_space<vmem>>, vector<256x128xf32>
    %cst_13 = arith.constant dense<0.000000e+00> : vector<16x128xf32>
    %19 = tpu.matmul %16, %18, %cst_13 {dimension_numbers = #tpu.dot_dimension_numbers<[1], [0], [0], [1], [0, 0, 1, 1], [], []>} : vector<16x256xf32>, vector<256x128xf32>, vector<16x128xf32> -> vector<16x128xf32>
    %20 = arith.addf %17, %19 : vector<16x128xf32>
    %c0_14 = arith.constant 0 : index
    %c0_15 = arith.constant 0 : index
    %21 = vector.load %arg6[%c0_14, %c0_15] : memref<16x128xf32, #tpu.memory_space<vmem>>, vector<16x128xf32>
    tpu.vector_store %arg6[%c0_14, %c0_15], %20 {strides = array<i32>} : memref<16x128xf32, #tpu.memory_space<vmem>>, vector<16x128xf32>,
    %c0_i32_16 = arith.constant 0 : i32
    %22 = arith.cmpi eq, %arg1, %c0_i32_16 : i32
    %23 = arith.extui %22 : i1 to i32
    %c0_i32_17 = arith.constant 0 : i32
    %24 = arith.cmpi ne, %23, %c0_i32_17 : i32
    scf.if %24 {
      %c0_18 = arith.constant 0 : index
      %c0_19 = arith.constant 0 : index
      %25 = vector.load %arg6[%c0_18, %c0_19] : memref<16x128xf32, #tpu.memory_space<vmem>>, vector<16x128xf32>
      %c0_20 = arith.constant 0 : index
      %c0_21 = arith.constant 0 : index
      %26 = vector.load %arg5[%c0_20, %c0_21] : memref<16x128xf32, #tpu.memory_space<vmem>>, vector<16x128xf32>
      tpu.vector_store %arg5[%c0_20, %c0_21], %25 {strides = array<i32>} : memref<16x128xf32, #tpu.memory_space<vmem>>, vector<16x128xf32>,
    } else {
    }
    return
  }
  func.func @transform_0(%arg0: i32, %arg1: i32) -> (i32, i32) {
    %c0_i32 = arith.constant 0 : i32
    %c0_i32_0 = arith.constant 0 : i32
    return %arg0, %c0_i32 : i32, i32
  }
  func.func @transform_1(%arg0: i32, %arg1: i32) -> (i32, i32, i32) {
    %c0_i32 = arith.constant 0 : i32
    %c0_i32_0 = arith.constant 0 : i32
    %c0_i32_1 = arith.constant 0 : i32
    return %c0_i32, %c0_i32_0, %arg1 : i32, i32, i32
  }
  func.func @transform_2(%arg0: i32, %arg1: i32) -> (i32, i32) {
    %c0_i32 = arith.constant 0 : i32
    %c0_i32_0 = arith.constant 0 : i32
    return %arg1, %c0_i32 : i32, i32
  }
  func.func @transform_3(%arg0: i32, %arg1: i32) -> (i32, i32) {
    %c0_i32 = arith.constant 0 : i32
    %c0_i32_0 = arith.constant 0 : i32
    return %arg0, %c0_i32 : i32, i32
  }
}

</mosaic_0001>

<llo_original>
// kernel: tpu_custom_call.1
$region0: #{tpu_custom_call.1}
  #allocation0 [shape = 'u32[]', space=smem, size = 0x4, offset = 0x4, fixed_abs, tag = 'smem constant byte address 0x4 - core index']
  #allocation1 [shape = 'u32[144,128]{1,0:T(1,128)}', space=vmem, size = 0x12000, scoped, tag = 'internal scratch']
  #allocation2 [shape = 'f32[16,128]{1,0:T(8,128)}', space=vmem, size = 0x2000, scoped, tag = 'scratch operand']
  %s0 = inlined_call_operand.hbm [shape: f32[16,128], index: 0, kind: input, shape index: {}]
  %s1 = inlined_call_operand.hbm [shape: f32[2,128,256], index: 1, kind: input, shape index: {}]
  %s2 = inlined_call_operand.hbm [shape: f32[256,128], index: 2, kind: input, shape index: {}]
  %s3 = inlined_call_operand.hbm [shape: f32[16,128], index: 3, kind: output, shape index: {}]
  %s4 = sld [smem:[#allocation0]]
  $region42: #{tpu_custom_call.1} parent=0
    _
  %s6 = ssub.s32 1, %s4
  %s7 = scalar_select 0, %s6, %s4
  $region1: #{tpu_custom_call.1} parent=0
    #allocation3 [shape = 'u8[8192]{0}', space=vmem, size = 0x2000, scoped, tag = 'input window, operand 0, single buffered']
    #allocation4 [shape = 's32[1]{0}', space=sflag, size = 0x4, scoped, tag = 'scoped memory for tpu_custom_call.1']
    #allocation5 [shape = 's32[1]{0}', space=sflag, size = 0x4, scoped, tag = 'scoped memory for tpu_custom_call.1']
    #allocation6 [shape = 'u8[262144]{0}', space=vmem, size = 0x40000, scoped, tag = 'input window, operand 1, single buffered']
    #allocation7 [shape = 's32[1]{0}', space=sflag, size = 0x4, scoped, tag = 'scoped memory for tpu_custom_call.1']
    #allocation8 [shape = 'u8[131072]{0}', space=vmem, size = 0x20000, scoped, tag = 'input window, operand 2, single buffered']
    #allocation9 [shape = 'u8[8192]{0}', space=vmem, size = 0x2000, scoped, tag = 'output window, operand 0, single buffered']
    %8 = vsyncpa [#allocation4], 0
    %9 = vsyncpa [#allocation7], 0
    %10 = vsyncpa [#allocation5], 0
    // Predicated region
    $region2: #{tpu_custom_call.1} parent=1 // pred_check
      _
    $region3: #{tpu_custom_call.1} parent=1 // pred_check_branch
      %12 = sbr.rel (0) target = $region5
    $region4: #{tpu_custom_call.1} parent=1 // pred_region
      %s14 = ssub.s32 256, 256
      %15 = vsyncadd [#allocation4], %s14
      %s16 = sshll.u32 [#allocation3], 4
      %s17 = int_to_ptr.vmem [resolvable:$true] %s16
      %22 = dma.hbm_to_vmem [thread:$0]  %s0, 256, %s17, [#allocation4], 128, 128, 8
    $region5: #{tpu_custom_call.1} parent=1 // pred_fallthru
      _
    // Predicated region
    $region6: #{tpu_custom_call.1} parent=1 // pred_check
      _
    $region7: #{tpu_custom_call.1} parent=1 // pred_check_branch
      %24 = sbr.rel (0) target = $region9
    $region8: #{tpu_custom_call.1} parent=1 // pred_region
      %s26 = ssub.s32 8192, 8192
      %27 = vsyncadd [#allocation7], %s26
      %s28 = sshll.u32 [#allocation6], 4
      %s29 = int_to_ptr.vmem [resolvable:$true] %s28
      %34 = dma.hbm_to_vmem [thread:$0]  %s1, 8192, %s29, [#allocation7], 256, 256, 16
    $region9: #{tpu_custom_call.1} parent=1 // pred_fallthru
      _
    // Predicated region
    $region10: #{tpu_custom_call.1} parent=1 // pred_check
      _
    $region11: #{tpu_custom_call.1} parent=1 // pred_check_branch
      %36 = sbr.rel (0) target = $region13
    $region12: #{tpu_custom_call.1} parent=1 // pred_region
      %s38 = ssub.s32 4096, 4096
      %39 = vsyncadd [#allocation7], %s38
      %s40 = sshll.u32 [#allocation8], 4
      %s41 = int_to_ptr.vmem [resolvable:$true] %s40
      %46 = dma.hbm_to_vmem [thread:$0]  %s2, 4096, %s41, [#allocation7], 128, 128, 8
    $region13: #{tpu_custom_call.1} parent=1 // pred_fallthru
      _
    // Predicated region
    $region14: #{tpu_custom_call.1} parent=1 // pred_check
      _
    $region15: #{tpu_custom_call.1} parent=1 // pred_check_branch
      %48 = sbr.rel (0) target = $region17
    $region16: #{tpu_custom_call.1} parent=1 // pred_region
      %49 = dma.done [#allocation4], 256
    $region17: #{tpu_custom_call.1} parent=1 // pred_fallthru
      _
    // Predicated region
    $region18: #{tpu_custom_call.1} parent=1 // pred_check
      _
    $region19: #{tpu_custom_call.1} parent=1 // pred_check_branch
      %51 = sbr.rel (0) target = $region21
    $region20: #{tpu_custom_call.1} parent=1 // pred_region
      %52 = dma.done [#allocation7], 8192
    $region21: #{tpu_custom_call.1} parent=1 // pred_fallthru
      _
    // Predicated region
    $region22: #{tpu_custom_call.1} parent=1 // pred_check
      _
    $region23: #{tpu_custom_call.1} parent=1 // pred_check_branch
      %54 = sbr.rel (0) target = $region25
    $region24: #{tpu_custom_call.1} parent=1 // pred_region
      %55 = dma.done [#allocation7], 4096
    $region25: #{tpu_custom_call.1} parent=1 // pred_fallthru
      _
    %p56 = scmp.eq.s32.totalorder 0, 0
    // Predicated region
    $region26: #{tpu_custom_call.1} parent=1 // pred_check
      %p57 = pneg %p56
    $region27: #{tpu_custom_call.1} parent=1 // pred_check_branch
      %59 = sbr.rel (%p57) target = $region29
    $region28: #{tpu_custom_call.1} parent=1 // pred_region
      %60 = vst [vmem:[#allocation2] sm:$0xff] 0.0
      %61 = vst [vmem:[#allocation2 + $0x8] sm:$0xff] 0.0
    $region29: #{tpu_custom_call.1} parent=1 // pred_fallthru
      _
    %v62 = vld [vmem:[#allocation3] sm:$0xff]
    %v63 = vld [vmem:[#allocation3 + $0x8] sm:$0xff]
    %v64 = vld [vmem:[#allocation6] sm:$0xff]
    %v65 = vld [vmem:[#allocation6 + $0x8] sm:$0xff]
    %v66 = vld [vmem:[#allocation6 + $0x10] sm:$0xff]
    %v67 = vld [vmem:[#allocation6 + $0x18] sm:$0xff]
    %v68 = vld [vmem:[#allocation6 + $0x20] sm:$0xff]
    %v69 = vld [vmem:[#allocation6 + $0x28] sm:$0xff]
    %v70 = vld [vmem:[#allocation6 + $0x30] sm:$0xff]
    %v71 = vld [vmem:[#allocation6 + $0x38] sm:$0xff]
    %v72 = vld [vmem:[#allocation6 + $0x40] sm:$0xff]
    %v73 = vld [vmem:[#allocation6 + $0x48] sm:$0xff]
    %v74 = vld [vmem:[#allocation6 + $0x50] sm:$0xff]
    %v75 = vld [vmem:[#allocation6 + $0x58] sm:$0xff]
    %v76 = vld [vmem:[#allocation6 + $0x60] sm:$0xff]
    %v77 = vld [vmem:[#allocation6 + $0x68] sm:$0xff]
    %v78 = vld [vmem:[#allocation6 + $0x70] sm:$0xff]
    %v79 = vld [vmem:[#allocation6 + $0x78] sm:$0xff]
    %v80 = vld [vmem:[#allocation6 + $0x80] sm:$0xff]
    %v81 = vld [vmem:[#allocation6 + $0x88] sm:$0xff]
    %v82 = vld [vmem:[#allocation6 + $0x90] sm:$0xff]
    %v83 = vld [vmem:[#allocation6 + $0x98] sm:$0xff]
    %v84 = vld [vmem:[#allocation6 + $0xa0] sm:$0xff]
    %v85 = vld [vmem:[#allocation6 + $0xa8] sm:$0xff]
    %v86 = vld [vmem:[#allocation6 + $0xb0] sm:$0xff]
    %v87 = vld [vmem:[#allocation6 + $0xb8] sm:$0xff]
    %v88 = vld [vmem:[#allocation6 + $0xc0] sm:$0xff]
    %v89 = vld [vmem:[#allocation6 + $0xc8] sm:$0xff]
    %v90 = vld [vmem:[#allocation6 + $0xd0] sm:$0xff]
    %v91 = vld [vmem:[#allocation6 + $0xd8] sm:$0xff]
    %v92 = vld [vmem:[#allocation6 + $0xe0] sm:$0xff]
    %v93 = vld [vmem:[#allocation6 + $0xe8] sm:$0xff]
    %v94 = vld [vmem:[#allocation6 + $0xf0] sm:$0xff]
    %v95 = vld [vmem:[#allocation6 + $0xf8] sm:$0xff]
    %96 = vmatprep.subr.mxu0 %v65
    %97 = vmatpush1.msra.mxu0 %v64
    %98 = vmatprep.subr.mxu0 %v67
    %99 = vmatpush1.msra.mxu0 %v66
    %100 = vmatprep.subr.mxu0 %v69
    %101 = vmatpush1.msra.mxu0 %v68
    %102 = vmatprep.subr.mxu0 %v71
    %103 = vmatpush1.msra.mxu0 %v70
    %104 = vmatprep.subr.mxu0 %v73
    %105 = vmatpush1.msra.mxu0 %v72
    %106 = vmatprep.subr.mxu0 %v75
    %107 = vmatpush1.msra.mxu0 %v74
    %108 = vmatprep.subr.mxu0 %v77
    %109 = vmatpush1.msra.mxu0 %v76
    %110 = vmatprep.subr.mxu0 %v79
    %111 = vmatpush1.msra.mxu0 %v78
    %112 = vmatprep.subr.mxu0 %v81
    %113 = vmatpush1.msra.mxu0 %v80
    %114 = vmatprep.subr.mxu0 %v83
    %115 = vmatpush1.msra.mxu0 %v82
    %116 = vmatprep.subr.mxu0 %v85
    %117 = vmatpush1.msra.mxu0 %v84
    %118 = vmatprep.subr.mxu0 %v87
    %119 = vmatpush1.msra.mxu0 %v86
    %120 = vmatprep.subr.mxu0 %v89
    %121 = vmatpush1.msra.mxu0 %v88
    %122 = vmatprep.subr.mxu0 %v91
    %123 = vmatpush1.msra.mxu0 %v90
    %124 = vmatprep.subr.mxu0 %v93
    %125 = vmatpush1.msra.mxu0 %v92
    %126 = vmatprep.subr.mxu0 %v95
    %127 = vmatpush1.msra.mxu0 %v94
    %128 = vmatprep.subr.mxu0 0.0
    %129 = vmatpush1.msra.mxu0 0.0
    %130 = vmatprep.subr.mxu0 0.0
    %131 = vmatpush1.msra.mxu0 0.0
    %132 = vmatprep.subr.mxu0 0.0
    %133 = vmatpush1.msra.mxu0 0.0
    %134 = vmatprep.subr.mxu0 0.0
    %135 = vmatpush1.msra.mxu0 0.0
    %136 = vmatprep.subr.mxu0 0.0
    %137 = vmatpush1.msra.mxu0 0.0
    %138 = vmatprep.subr.mxu0 0.0
    %139 = vmatpush1.msra.mxu0 0.0
    %140 = vmatprep.subr.mxu0 0.0
    %141 = vmatpush1.msra.mxu0 0.0
    %142 = vmatprep.subr.mxu0 0.0
    %143 = vmatpush1.msra.mxu0 0.0
    %144 = vmatprep.subr.mxu0 0.0
    %145 = vmatpush1.msra.mxu0 0.0
    %146 = vmatprep.subr.mxu0 0.0
    %147 = vmatpush1.msra.mxu0 0.0
    %148 = vmatprep.subr.mxu0 0.0
    %149 = vmatpush1.msra.mxu0 0.0
    %150 = vmatprep.subr.mxu0 0.0
    %151 = vmatpush1.msra.mxu0 0.0
    %152 = vmatprep.subr.mxu0 0.0
    %153 = vmatpush1.msra.mxu0 0.0
    %154 = vmatprep.subr.mxu0 0.0
    %155 = vmatpush1.msra.mxu0 0.0
    %156 = vmatprep.subr.mxu0 0.0
    %157 = vmatpush1.msra.mxu0 0.0
    %158 = vmatprep.subr.mxu0 0.0
    %159 = vmatpush1.msra.mxu0 0.0
    %160 = vmatprep.mubr.f32.mxu0 0.0
    %161 = vmatmul.mubr.f32.gmra.mrb[0].mxu0 %v62
    %v162 = vpop.f32.mrb[0].mxu0
    %v163 = vadd.f32 0.0, %v162
    %v164 = vpop.f32.mrb[0].mxu0
    %v165 = vadd.f32 0.0, %v164
    %166 = vmatprep.mubr.f32.mxu0 0.0
    %167 = vmatmul.mubr.f32.gmra.mrb[0].mxu0 %v63
    %v168 = vpop.f32.mrb[0].mxu0
    %v169 = vadd.f32 0.0, %v168
    %v170 = vpop.f32.mrb[0].mxu0
    %v171 = vadd.f32 0.0, %v170
    %172 = vdwg.mxu0
    %s173 = scalar_lea.vmem [#allocation6], 256
    %v174 = vld [vmem:[%s173] sm:$0xff]
    %v175 = vld [vmem:[%s173 + $0x8] sm:$0xff]
    %v176 = vld [vmem:[%s173 + $0x10] sm:$0xff]
    %v177 = vld [vmem:[%s173 + $0x18] sm:$0xff]
    %v178 = vld [vmem:[%s173 + $0x20] sm:$0xff]
    %v179 = vld [vmem:[%s173 + $0x28] sm:$0xff]
    %v180 = vld [vmem:[%s173 + $0x30] sm:$0xff]
    %v181 = vld [vmem:[%s173 + $0x38] sm:$0xff]
    %v182 = vld [vmem:[%s173 + $0x40] sm:$0xff]
    %v183 = vld [vmem:[%s173 + $0x48] sm:$0xff]
    %v184 = vld [vmem:[%s173 + $0x50] sm:$0xff]
    %v185 = vld [vmem:[%s173 + $0x58] sm:$0xff]
    %v186 = vld [vmem:[%s173 + $0x60] sm:$0xff]
    %v187 = vld [vmem:[%s173 + $0x68] sm:$0xff]
    %v188 = vld [vmem:[%s173 + $0x70] sm:$0xff]
    %v189 = vld [vmem:[%s173 + $0x78] sm:$0xff]
    %v190 = vld [vmem:[%s173 + $0x80] sm:$0xff]
    %v191 = vld [vmem:[%s173 + $0x88] sm:$0xff]
    %v192 = vld [vmem:[%s173 + $0x90] sm:$0xff]
    %v193 = vld [vmem:[%s173 + $0x98] sm:$0xff]
    %v194 = vld [vmem:[%s173 + $0xa0] sm:$0xff]
    %v195 = vld [vmem:[%s173 + $0xa8] sm:$0xff]
    %v196 = vld [vmem:[%s173 + $0xb0] sm:$0xff]
    %v197 = vld [vmem:[%s173 + $0xb8] sm:$0xff]
    %v198 = vld [vmem:[%s173 + $0xc0] sm:$0xff]
    %v199 = vld [vmem:[%s173 + $0xc8] sm:$0xff]
    %v200 = vld [vmem:[%s173 + $0xd0] sm:$0xff]
    %v201 = vld [vmem:[%s173 + $0xd8] sm:$0xff]
    %v202 = vld [vmem:[%s173 + $0xe0] sm:$0xff]
    %v203 = vld [vmem:[%s173 + $0xe8] sm:$0xff]
    %v204 = vld [vmem:[%s173 + $0xf0] sm:$0xff]
    %v205 = vld [vmem:[%s173 + $0xf8] sm:$0xff]
    %206 = vmatprep.subr.mxu0 %v175
    %207 = vmatpush1.msra.mxu0 %v174
    %208 = vmatprep.subr.mxu0 %v177
    %209 = vmatpush1.msra.mxu0 %v176
    %210 = vmatprep.subr.mxu0 %v179
    %211 = vmatpush1.msra.mxu0 %v178
    %212 = vmatprep.subr.mxu0 %v181
    %213 = vmatpush1.msra.mxu0 %v180
    %214 = vmatprep.subr.mxu0 %v183
    %215 = vmatpush1.msra.mxu0 %v182
    %216 = vmatprep.subr.mxu0 %v185
    %217 = vmatpush1.msra.mxu0 %v184
    %218 = vmatprep.subr.mxu0 %v187
    %219 = vmatpush1.msra.mxu0 %v186
    %220 = vmatprep.subr.mxu0 %v189
    %221 = vmatpush1.msra.mxu0 %v188
    %222 = vmatprep.subr.mxu0 %v191
    %223 = vmatpush1.msra.mxu0 %v190
    %224 = vmatprep.subr.mxu0 %v193
    %225 = vmatpush1.msra.mxu0 %v192
    %226 = vmatprep.subr.mxu0 %v195
    %227 = vmatpush1.msra.mxu0 %v194
    %228 = vmatprep.subr.mxu0 %v197
    %229 = vmatpush1.msra.mxu0 %v196
    %230 = vmatprep.subr.mxu0 %v199
    %231 = vmatpush1.msra.mxu0 %v198
    %232 = vmatprep.subr.mxu0 %v201
    %233 = vmatpush1.msra.mxu0 %v200
    %234 = vmatprep.subr.mxu0 %v203
    %235 = vmatpush1.msra.mxu0 %v202
    %236 = vmatprep.subr.mxu0 %v205
    %237 = vmatpush1.msra.mxu0 %v204
    %238 = vmatprep.subr.mxu0 0.0
    %239 = vmatpush1.msra.mxu0 0.0
    %240 = vmatprep.subr.mxu0 0.0
    %241 = vmatpush1.msra.mxu0 0.0
    %242 = vmatprep.subr.mxu0 0.0
    %243 = vmatpush1.msra.mxu0 0.0
    %244 = vmatprep.subr.mxu0 0.0
    %245 = vmatpush1.msra.mxu0 0.0
    %246 = vmatprep.subr.mxu0 0.0
    %247 = vmatpush1.msra.mxu0 0.0
    %248 = vmatprep.subr.mxu0 0.0
    %249 = vmatpush1.msra.mxu0 0.0
    %250 = vmatprep.subr.mxu0 0.0
    %251 = vmatpush1.msra.mxu0 0.0
    %252 = vmatprep.subr.mxu0 0.0
    %253 = vmatpush1.msra.mxu0 0.0
    %254 = vmatprep.subr.mxu0 0.0
    %255 = vmatpush1.msra.mxu0 0.0
    %256 = vmatprep.subr.mxu0 0.0
    %257 = vmatpush1.msra.mxu0 0.0
    %258 = vmatprep.subr.mxu0 0.0
    %259 = vmatpush1.msra.mxu0 0.0
    %260 = vmatprep.subr.mxu0 0.0
    %261 = vmatpush1.msra.mxu0 0.0
    %262 = vmatprep.subr.mxu0 0.0
    %263 = vmatpush1.msra.mxu0 0.0
    %264 = vmatprep.subr.mxu0 0.0
    %265 = vmatpush1.msra.mxu0 0.0
    %266 = vmatprep.subr.mxu0 0.0
    %267 = vmatpush1.msra.mxu0 0.0
    %268 = vmatprep.subr.mxu0 0.0
    %269 = vmatpush1.msra.mxu0 0.0
    %270 = vmatprep.mubr.f32.mxu0 0.0
    %271 = vmatmul.mubr.f32.gmra.mrb[0].mxu0 %v62
    %v272 = vpop.f32.mrb[0].mxu0
    %v273 = vadd.f32 0.0, %v272
    %v274 = vpop.f32.mrb[0].mxu0
    %v275 = vadd.f32 0.0, %v274
    %276 = vmatprep.mubr.f32.mxu0 0.0
    %277 = vmatmul.mubr.f32.gmra.mrb[0].mxu0 %v63
    %v278 = vpop.f32.mrb[0].mxu0
    %v279 = vadd.f32 0.0, %v278
    %v280 = vpop.f32.mrb[0].mxu0
    %v281 = vadd.f32 0.0, %v280
    %282 = vdwg.mxu0
    %v283 = vxor.u32 %v163, 2147483648
    %v284 = vxor.u32 %v165, 2147483648
    %v285 = vxor.u32 %v169, 2147483648
    %v286 = vxor.u32 %v171, 2147483648
    %v287 = vmul.f32 %v283, 1.442695
    %v288 = vpow.pop %v287
    %v289 = vmul.f32 %v284, 1.442695
    %v290 = vpow.pop %v289
    %v291 = vmul.f32 %v285, 1.442695
    %v292 = vpow.pop %v291
    %v293 = vmul.f32 %v286, 1.442695
    %v294 = vpow.pop %v293
    %v295 = vadd.f32 %v288, 1.0
    %v296 = vadd.f32 %v290, 1.0
    %v297 = vadd.f32 %v292, 1.0
    %v298 = vadd.f32 %v294, 1.0
    %v299 = vrcp.pop %v295
    %v300 = vmul.f32 1.0, %v299
    %v301 = vrcp.pop %v296
    %v302 = vmul.f32 1.0, %v301
    %v303 = vrcp.pop %v297
    %v304 = vmul.f32 1.0, %v303
    %v305 = vrcp.pop %v298
    %v306 = vmul.f32 1.0, %v305
    %v307 = vmul.f32 %v163, %v300
    %v308 = vmul.f32 %v165, %v302
    %v309 = vmul.f32 %v169, %v304
    %v310 = vmul.f32 %v171, %v306
    %v311 = vmul.f32 %v307, %v273
    %v312 = vmul.f32 %v308, %v275
    %v313 = vmul.f32 %v309, %v279
    %v314 = vmul.f32 %v310, %v281
    %v315 = vld [vmem:[#allocation2] sm:$0xff]
    %v316 = vld [vmem:[#allocation2 + $0x8] sm:$0xff]
    %v317 = vld [vmem:[#allocation8] sm:$0xff]
    %v318 = vld [vmem:[#allocation8 + $0x8] sm:$0xff]
    %v319 = vld [vmem:[#allocation8 + $0x10] sm:$0xff]
    %v320 = vld [vmem:[#allocation8 + $0x18] sm:$0xff]
    %v321 = vld [vmem:[#allocation8 + $0x20] sm:$0xff]
    %v322 = vld [vmem:[#allocation8 + $0x28] sm:$0xff]
    %v323 = vld [vmem:[#allocation8 + $0x30] sm:$0xff]
    %v324 = vld [vmem:[#allocation8 + $0x38] sm:$0xff]
    %v325 = vld [vmem:[#allocation8 + $0x40] sm:$0xff]
    %v326 = vld [vmem:[#allocation8 + $0x48] sm:$0xff]
    %v327 = vld [vmem:[#allocation8 + $0x50] sm:$0xff]
    %v328 = vld [vmem:[#allocation8 + $0x58] sm:$0xff]
    %v329 = vld [vmem:[#allocation8 + $0x60] sm:$0xff]
    %v330 = vld [vmem:[#allocation8 + $0x68] sm:$0xff]
    %v331 = vld [vmem:[#allocation8 + $0x70] sm:$0xff]
    %v332 = vld [vmem:[#allocation8 + $0x78] sm:$0xff]
    %v333 = vld [vmem:[#allocation8 + $0x80] sm:$0xff]
    %v334 = vld [vmem:[#allocation8 + $0x88] sm:$0xff]
    %v335 = vld [vmem:[#allocation8 + $0x90] sm:$0xff]
    %v336 = vld [vmem:[#allocation8 + $0x98] sm:$0xff]
    %v337 = vld [vmem:[#allocation8 + $0xa0] sm:$0xff]
    %v338 = vld [vmem:[#allocation8 + $0xa8] sm:$0xff]
    %v339 = vld [vmem:[#allocation8 + $0xb0] sm:$0xff]
    %v340 = vld [vmem:[#allocation8 + $0xb8] sm:$0xff]
    %v341 = vld [vmem:[#allocation8 + $0xc0] sm:$0xff]
    %v342 = vld [vmem:[#allocation8 + $0xc8] sm:$0xff]
    %v343 = vld [vmem:[#allocation8 + $0xd0] sm:$0xff]
    %v344 = vld [vmem:[#allocation8 + $0xd8] sm:$0xff]
    %v345 = vld [vmem:[#allocation8 + $0xe0] sm:$0xff]
    %v346 = vld [vmem:[#allocation8 + $0xe8] sm:$0xff]
    %v347 = vld [vmem:[#allocation8 + $0xf0] sm:$0xff]
    %v348 = vld [vmem:[#allocation8 + $0xf8] sm:$0xff]
    %349 = vmatprep.subr.mxu0 0.0
    %350 = vmatpush1.msra.mxu0 %v317
    %351 = vmatprep.subr.mxu0 0.0
    %352 = vmatpush1.msra.mxu0 %v318
    %353 = vmatprep.subr.mxu0 0.0
    %354 = vmatpush1.msra.mxu0 %v319
    %355 = vmatprep.subr.mxu0 0.0
    %356 = vmatpush1.msra.mxu0 %v320
    %357 = vmatprep.subr.mxu0 0.0
    %358 = vmatpush1.msra.mxu0 %v321
    %359 = vmatprep.subr.mxu0 0.0
    %360 = vmatpush1.msra.mxu0 %v322
    %361 = vmatprep.subr.mxu0 0.0
    %362 = vmatpush1.msra.mxu0 %v323
    %363 = vmatprep.subr.mxu0 0.0
    %364 = vmatpush1.msra.mxu0 %v324
    %365 = vmatprep.subr.mxu0 0.0
    %366 = vmatpush1.msra.mxu0 %v325
    %367 = vmatprep.subr.mxu0 0.0
    %368 = vmatpush1.msra.mxu0 %v326
    %369 = vmatprep.subr.mxu0 0.0
    %370 = vmatpush1.msra.mxu0 %v327
    %371 = vmatprep.subr.mxu0 0.0
    %372 = vmatpush1.msra.mxu0 %v328
    %373 = vmatprep.subr.mxu0 0.0
    %374 = vmatpush1.msra.mxu0 %v329
    %375 = vmatprep.subr.mxu0 0.0
    %376 = vmatpush1.msra.mxu0 %v330
    %377 = vmatprep.subr.mxu0 0.0
    %378 = vmatpush1.msra.mxu0 %v331
    %379 = vmatprep.subr.mxu0 0.0
    %380 = vmatpush1.msra.mxu0 %v332
    %381 = vmatprep.subr.mxu0 0.0
    %382 = vmatpush1.msra.mxu0 %v333
    %383 = vmatprep.subr.mxu0 0.0
    %384 = vmatpush1.msra.mxu0 %v334
    %385 = vmatprep.subr.mxu0 0.0
    %386 = vmatpush1.msra.mxu0 %v335
    %387 = vmatprep.subr.mxu0 0.0
    %388 = vmatpush1.msra.mxu0 %v336
    %389 = vmatprep.subr.mxu0 0.0
    %390 = vmatpush1.msra.mxu0 %v337
    %391 = vmatprep.subr.mxu0 0.0
    %392 = vmatpush1.msra.mxu0 %v338
    %393 = vmatprep.subr.mxu0 0.0
    %394 = vmatpush1.msra.mxu0 %v339
    %395 = vmatprep.subr.mxu0 0.0
    %396 = vmatpush1.msra.mxu0 %v340
    %397 = vmatprep.subr.mxu0 0.0
    %398 = vmatpush1.msra.mxu0 %v341
    %399 = vmatprep.subr.mxu0 0.0
    %400 = vmatpush1.msra.mxu0 %v342
    %401 = vmatprep.subr.mxu0 0.0
    %402 = vmatpush1.msra.mxu0 %v343
    %403 = vmatprep.subr.mxu0 0.0
    %404 = vmatpush1.msra.mxu0 %v344
    %405 = vmatprep.subr.mxu0 0.0
    %406 = vmatpush1.msra.mxu0 %v345
    %407 = vmatprep.subr.mxu0 0.0
    %408 = vmatpush1.msra.mxu0 %v346
    %409 = vmatprep.subr.mxu0 0.0
    %410 = vmatpush1.msra.mxu0 %v347
    %411 = vmatprep.subr.mxu0 0.0
    %412 = vmatpush1.msra.mxu0 %v348
    %413 = vmatprep.mubr.f32.mxu0 %v312
    %414 = vmatmul.mubr.f32.gmra.mrb[0].mxu0 %v311
    %v415 = vpop.f32.mrb[0].mxu0
    %v416 = vadd.f32 0.0, %v415
    %v417 = vpop.f32.mrb[0].mxu0
    %418 = vmatprep.mubr.f32.mxu0 %v314
    %419 = vmatmul.mubr.f32.gmra.mrb[0].mxu0 %v313
    %v420 = vpop.f32.mrb[0].mxu0
    %v421 = vadd.f32 0.0, %v420
    %v422 = vpop.f32.mrb[0].mxu0
    %423 = vdwg.mxu0
    %v424 = vadd.f32 %v315, %v416
    %v425 = vadd.f32 %v316, %v421
    %426 = vst [vmem:[#allocation2] sm:$0xff] %v424
    %427 = vst [vmem:[#allocation2 + $0x8] sm:$0xff] %v425
    // Predicated region
    $region30: #{tpu_custom_call.1} parent=1 // pred_check
      %p428 = pneg %p56
    $region31: #{tpu_custom_call.1} parent=1 // pred_check_branch
      %430 = sbr.rel (%p428) target = $region33
    $region32: #{tpu_custom_call.1} parent=1 // pred_region
      %v431 = vld [vmem:[#allocation2] sm:$0xff]
      %v432 = vld [vmem:[#allocation2 + $0x8] sm:$0xff]
      %433 = vst [vmem:[#allocation9] sm:$0xff] %v431
      %434 = vst [vmem:[#allocation9 + $0x8] sm:$0xff] %v432
    $region33: #{tpu_custom_call.1} parent=1 // pred_fallthru
      _
    // Predicated region
    $region34: #{tpu_custom_call.1} parent=1 // pred_check
      _
    $region35: #{tpu_custom_call.1} parent=1 // pred_check_branch
      %436 = sbr.rel (0) target = $region37
    $region36: #{tpu_custom_call.1} parent=1 // pred_region
      %s438 = ssub.s32 256, 256
      %439 = vsyncadd [#allocation5], %s438
      %s440 = sshll.u32 [#allocation9], 4
      %s441 = int_to_ptr.vmem [resolvable:$true] %s440
      %446 = dma.vmem_to_hbm [thread:$0]  %s441, 256, %s3, [#allocation5], 128, 128, 8
    $region37: #{tpu_custom_call.1} parent=1 // pred_fallthru
      _
    // Predicated region
    $region38: #{tpu_custom_call.1} parent=1 // pred_check
      _
    $region39: #{tpu_custom_call.1} parent=1 // pred_check_branch
      %448 = sbr.rel (0) target = $region41
    $region40: #{tpu_custom_call.1} parent=1 // pred_region
      %449 = dma.done [#allocation5], 256
    $region41: #{tpu_custom_call.1} parent=1 // pred_fallthru
      _
    %450 = vsyncpa [#allocation4], 1
    %451 = vsyncpa [#allocation7], 1
    %452 = vsyncpa [#allocation5], 1

</llo_original>
